<compile_context>
chip_gen: v7x
topology: tpu7x:2x2x1
jax: 0.10.0
libtpu: 0.0.40
codegen_flags: <defaults>
</compile_context>

<pallas_src>
import functools

import jax
import jax.numpy as jnp
from jax.experimental import pallas as pl
from jax.experimental.pallas import tpu as pltpu

IGNORE_INDEX = -1
SMOOTH = 1e-6
GAMMA = 2.0          # focal exponent; realized as an explicit square below
FOCAL_WEIGHT = 0.7
DICE_WEIGHT = 0.3
# Deterministic "parameters" from FocalLoss.__init__ (adaptive alpha weights).
DEFAULT_ALPHA = (10.0, 8.0, 25.0, 50.0, 50.0, 1.0, 1.0, 10.0)


def _combined_loss_kernel(logits_ref, tgt_ref,
                          focal_ref, inter_ref, psum_ref, osum_ref,
                          *, hw, chunk, n_chunks, tiles_per_split, ragged,
                          alpha):
    """Grid = (batch, tile_split, pixel_tiles); per-(image, split) partials."""
    s = pl.program_id(1)
    i = pl.program_id(2)

    @pl.when(i == 0)
    def _():
        focal_ref[...] = jnp.zeros_like(focal_ref)
        inter_ref[...] = jnp.zeros_like(inter_ref)
        psum_ref[...] = jnp.zeros_like(psum_ref)
        osum_ref[...] = jnp.zeros_like(osum_ref)

    c = logits_ref.shape[1]
    tile = logits_ref.shape[2]
    # Global pixel offset of this tile (unclamped -> OOB tiles mask to zero).
    tile_start = (s * tiles_per_split + i) * tile

    def process_chunk(lg, tg, pix0):
        """lg: (C, chunk) f32 logits, tg: (1, chunk) int32 targets."""
        valid = tg != IGNORE_INDEX                               # (1, chunk)
        if ragged:
            # Static branch: only traced when some lanes of some tile can be
            # out of bounds.  jnp.where is a bitwise select, so NaN/Inf bit
            # patterns in the padded HBM region cannot propagate.
            pix = jax.lax.broadcasted_iota(jnp.int32, tg.shape, 1) + pix0
            in_bounds = pix < hw
            valid = jnp.logical_and(valid, in_bounds)
            lg = jnp.where(in_bounds, lg, 0.0)
        validf = valid.astype(jnp.float32)

        # softmax pieces over the class (sublane) axis: 3 sublane reductions
        m = jnp.max(lg, axis=0, keepdims=True)                   # (1, chunk)
        ez = jnp.exp(lg - m)                                     # (C, chunk)
        sez = jnp.sum(ez, axis=0, keepdims=True)                 # (1, chunk)

        tclamped = jnp.clip(tg, 0, c - 1)                        # (1, chunk)
        class_ids = jax.lax.broadcasted_iota(jnp.int32, lg.shape, 0)
        onehot = (class_ids == tclamped).astype(jnp.float32)     # (C, chunk)

        # ce = logsumexp - logit[target]   (no log-softmax temporary)
        logit_t = jnp.sum(onehot * lg, axis=0, keepdims=True)    # (1, chunk)
        ce = jnp.where(valid, (m + jnp.log(sez)) - logit_t, 0.0)
        pt = jnp.exp(-ce)                                        # == probs[target]

        # alpha_t via compile-time select chain (VPU only, no class reduce)
        alpha_t = jnp.full(tg.shape, alpha[0], jnp.float32)
        for k in range(1, c):
            alpha_t = jnp.where(tclamped == k, alpha[k], alpha_t)

        one_m_pt = 1.0 - pt
        focal = alpha_t * one_m_pt * one_m_pt * ce               # gamma == 2
        f_p = jnp.sum(focal, axis=1, keepdims=True)              # (1, 1)

        # Dice partials over valid pixels (probs only needed for psum).
        rv = pl.reciprocal(sez) * validf                         # (1, chunk)
        ptv = pt * validf
        inter_p = jnp.sum(onehot * ptv, axis=1, keepdims=True)   # (C, 1)
        psum_p = jnp.sum(ez * rv, axis=1, keepdims=True)         # (C, 1)
        osum_p = jnp.sum(onehot * validf, axis=1, keepdims=True) # (C, 1)
        return f_p, inter_p, psum_p, osum_p

    if n_chunks == 1:
        f_p, i_p, p_p, o_p = process_chunk(
            logits_ref[0].astype(jnp.float32), tgt_ref[0], tile_start)
    else:
        def body(ci, carry):
            f_a, i_a, p_a, o_a = carry
            st = pl.multiple_of(ci * chunk, chunk)
            lg = logits_ref[0, :, pl.ds(st, chunk)].astype(jnp.float32)
            tg = tgt_ref[0, :, pl.ds(st, chunk)]
            f_p, i_p, p_p, o_p = process_chunk(lg, tg, tile_start + ci * chunk)
            return (f_a + f_p, i_a + i_p, p_a + p_p, o_a + o_p)

        init = (jnp.zeros((1, 1), jnp.float32),
                jnp.zeros((c, 1), jnp.float32),
                jnp.zeros((c, 1), jnp.float32),
                jnp.zeros((c, 1), jnp.float32))
        f_p, i_p, p_p, o_p = jax.lax.fori_loop(0, n_chunks, body, init,
                                               unroll=True)

    # One resident-accumulator update per tile.
    focal_ref[0, 0] += f_p
    inter_ref[0, 0] += i_p
    psum_ref[0, 0] += p_p
    osum_ref[0, 0] += o_p


@functools.partial(jax.jit,
                   static_argnames=("alpha", "tile_pixels", "chunk_pixels"))
def combined_loss(logits_nchw, targets_nhw, alpha=DEFAULT_ALPHA,
                  tile_pixels=32768, chunk_pixels=4096):
    n, c, h, w = logits_nchw.shape
    hw = h * w
    alpha = tuple(float(a) for a in alpha)
    assert len(alpha) == c

    # Free reshapes only -- no transpose, no pad, no dtype change in HBM.
    logits = logits_nchw.reshape(n, c, hw)
    targets = targets_nhw.reshape(n, 1, hw).astype(jnp.int32)

    # bf16 logits stream at half the bytes/pixel: double the DMA tile so each
    # block stays >= ~1 MiB (the kernel upcasts on-chip).
    if logits.dtype == jnp.bfloat16:
        tile_pixels *= 2

    # --- tile (DMA block) / chunk (compute sub-block) selection -------------
    chunk = max(128, (min(chunk_pixels, tile_pixels) // 128) * 128)
    if hw <= tile_pixels:
        tile = hw                       # one full-width pixel tile
        chunk = hw
        n_chunks = 1
    else:
        max_chunks = max(1, tile_pixels // chunk)
        tile = 0
        # Prefer a tile that divides H*W exactly (skips the ragged mask).
        for k in range(max_chunks, 0, -1):
            if hw % (k * chunk) == 0:
                tile = k * chunk
                break
        if tile == 0:
            tile = max_chunks * chunk
        n_chunks = tile // chunk
    num_tiles = pl.cdiv(hw, tile)

    # Second *parallel* grid axis: split the pixel-tile range in two so a v7x
    # megacore keeps both TensorCores busy even at batch == 1 (no-op on
    # single-core v5e/v6e).
    n_split = 2 if num_tiles >= 2 else 1
    tiles_per_split = pl.cdiv(num_tiles, n_split)
    ragged = (n_split * tiles_per_split * tile) != hw
    last_blk = num_tiles - 1

    def in_map(b, s, i):
        # Clamp fully out-of-range tiles (odd tile counts) onto the last real
        # HBM block; their lanes are masked out inside the kernel.
        return (b, 0, jnp.minimum(s * tiles_per_split + i, last_blk))

    kernel = functools.partial(
        _combined_loss_kernel, hw=hw, chunk=chunk, n_chunks=n_chunks,
        tiles_per_split=tiles_per_split, ragged=ragged, alpha=alpha)

    # VMEM budget: double-buffered input blocks + in-flight f32 chunk
    # temporaries + slack, clamped to a scoped limit that is safe on every
    # generation (v7x has only 64 MiB physical VMEM per TensorCore).
    in_bytes = 2 * (c * tile * logits.dtype.itemsize + tile * 4)
    tmp_bytes = 20 * c * chunk * 4
    vmem_limit = int(min(max(in_bytes + tmp_bytes + (2 << 20), 8 << 20),
                         32 << 20))

    focal_p, inter_p, psum_p, osum_p = pl.pallas_call(
        kernel,
        out_shape=(
            jax.ShapeDtypeStruct((n, n_split, 1, 1), jnp.float32),  # focal sum
            jax.ShapeDtypeStruct((n, n_split, c, 1), jnp.float32),  # intersection
            jax.ShapeDtypeStruct((n, n_split, c, 1), jnp.float32),  # probs sum
            jax.ShapeDtypeStruct((n, n_split, c, 1), jnp.float32),  # one-hot sum
        ),
        grid_spec=pltpu.PrefetchScalarGridSpec(
            num_scalar_prefetch=0,
            grid=(n, n_split, tiles_per_split),
            in_specs=[
                pl.BlockSpec((1, c, tile), in_map),
                pl.BlockSpec((1, 1, tile), in_map),
            ],
            out_specs=[
                pl.BlockSpec((1, 1, 1, 1), lambda b, s, i: (b, s, 0, 0)),
                pl.BlockSpec((1, 1, c, 1), lambda b, s, i: (b, s, 0, 0)),
                pl.BlockSpec((1, 1, c, 1), lambda b, s, i: (b, s, 0, 0)),
                pl.BlockSpec((1, 1, c, 1), lambda b, s, i: (b, s, 0, 0)),
            ],
        ),
        compiler_params=pltpu.CompilerParams(
            dimension_semantics=("parallel", "parallel", "arbitrary"),
            vmem_limit_bytes=vmem_limit),
    )(logits, targets)

    # Tiny final combine (a handful of elements) in plain JAX.
    valid_count = jnp.sum(osum_p)            # == number of valid pixels
    focal_loss = jnp.sum(focal_p) / jnp.maximum(valid_count, 1.0)
    inter = jnp.sum(inter_p, axis=(0, 1))[:, 0]
    union = jnp.sum(psum_p, axis=(0, 1))[:, 0] + jnp.sum(osum_p, axis=(0, 1))[:, 0]
    dice = (2.0 * inter + SMOOTH) / (union + SMOOTH)
    dice_loss = 1.0 - jnp.mean(dice)
    return FOCAL_WEIGHT * focal_loss + DICE_WEIGHT * dice_loss


def _reference_combined_loss(logits_nchw, targets_nhw, alpha):
    """Pure-JAX re-implementation of the PyTorch module, for verification."""
    n, c, h, w = logits_nchw.shape
    logits = jnp.transpose(logits_nchw, (0, 2, 3, 1)).reshape(-1, c)
    tgt = targets_nhw.reshape(-1).astype(jnp.int32)
    valid = tgt != IGNORE_INDEX
    logp = jax.nn.log_softmax(logits.astype(jnp.float32), axis=-1)
    probs = jnp.exp(logp)
    tc = jnp.clip(tgt, 0, c - 1)
    onehot = jax.nn.one_hot(tc, c, dtype=jnp.float32)
    ce = -jnp.sum(onehot * logp, axis=-1)
    ce = jnp.where(valid, ce, 0.0)
    pt = jnp.exp(-ce)
    alpha_t = jnp.where(valid, jnp.asarray(alpha, jnp.float32)[tc], 0.0)
    focal = jnp.where(valid, alpha_t * (1.0 - pt) ** GAMMA * ce, 0.0)
    focal_loss = jnp.sum(focal) / jnp.maximum(jnp.sum(valid), 1)
    vf = valid.astype(jnp.float32)[:, None]
    inter = jnp.sum(probs * onehot * vf, axis=0)
    union = jnp.sum(probs * vf, axis=0) + jnp.sum(onehot * vf, axis=0)
    dice = (2.0 * inter + SMOOTH) / (union + SMOOTH)
    dice_loss = 1.0 - jnp.mean(dice)
    return FOCAL_WEIGHT * focal_loss + DICE_WEIGHT * dice_loss


if __name__ == "__main__":
    key = jax.random.PRNGKey(0)
    k = jax.random.split(key, 6)
    batch, num_classes = 2, 8

    # Case 1: H*W fits in a single pixel tile (fast path: no ragged mask,
    # no inner chunk loop, no tile split).
    h = w = 16
    logits = jax.random.normal(k[0], (batch, num_classes, h, w), jnp.float32)
    targets = jax.random.randint(k[1], (batch, h, w), -1, num_classes)
    loss = jax.block_until_ready(combined_loss(logits, targets))
    ref = _reference_combined_loss(logits, targets, DEFAULT_ALPHA)
    assert jnp.allclose(loss, ref, rtol=1e-5, atol=1e-5), (loss, ref)

    # Case 2: ragged last pixel tile + 2-way tile split (the second split's
    # block is partially out of bounds and gets masked in-kernel).
    h2 = w2 = 20
    logits2 = jax.random.normal(k[2], (batch, num_classes, h2, w2), jnp.float32)
    targets2 = jax.random.randint(k[3], (batch, h2, w2), -1, num_classes)
    loss2 = jax.block_until_ready(
        combined_loss(logits2, targets2, tile_pixels=256))
    ref2 = _reference_combined_loss(logits2, targets2, DEFAULT_ALPHA)
    assert jnp.allclose(loss2, ref2, rtol=1e-5, atol=1e-5), (loss2, ref2)

    # Case 3: multi-chunk inner loop (unrolled fori), tile split, and a fully
    # out-of-range trailing tile whose HBM block index is clamped.
    h3 = w3 = 48
    logits3 = jax.random.normal(k[4], (batch, num_classes, h3, w3), jnp.float32)
    targets3 = jax.random.randint(k[5], (batch, h3, w3), -1, num_classes)
    loss3 = jax.block_until_ready(
        combined_loss(logits3, targets3, tile_pixels=1024, chunk_pixels=256))
    ref3 = _reference_combined_loss(logits3, targets3, DEFAULT_ALPHA)
    assert jnp.allclose(loss3, ref3, rtol=1e-5, atol=1e-5), (loss3, ref3)

    print("KERNEL_OK")
</pallas_src>

<mosaic_0001>
module attributes {stable_mosaic.version = 11 : i64} {
  func.func @_combined_loss_kernel(%arg0: i32, %arg1: i32, %arg2: i32, %arg3: memref<1x8x256xf32, #tpu.memory_space<vmem>>, %arg4: memref<1x1x256xi32, #tpu.memory_space<vmem>>, %arg5: memref<1x1x1x1xf32, #tpu.memory_space<vmem>>, %arg6: memref<1x1x8x1xf32, #tpu.memory_space<vmem>>, %arg7: memref<1x1x8x1xf32, #tpu.memory_space<vmem>>, %arg8: memref<1x1x8x1xf32, #tpu.memory_space<vmem>>) attributes {dimension_semantics = [#tpu.dimension_semantics<parallel>, #tpu.dimension_semantics<parallel>, #tpu.dimension_semantics<arbitrary>], iteration_bounds = array<i64: 2, 1, 1>, scalar_prefetch = 0 : i64, scratch_operands = 0 : i64, tpu.core_type = #tpu.core_type<tc>, window_params = [{transform_indices = @transform_0, window_bounds = array<i64: 1, 8, 256>}, {transform_indices = @transform_1, window_bounds = array<i64: 1, 1, 256>}, {transform_indices = @transform_2, window_bounds = array<i64: 1, 1, 1, 1>}, {transform_indices = @transform_3, window_bounds = array<i64: 1, 1, 8, 1>}, {transform_indices = @transform_4, window_bounds = array<i64: 1, 1, 8, 1>}, {transform_indices = @transform_5, window_bounds = array<i64: 1, 1, 8, 1>}]} {
    %c0_i32 = arith.constant 0 : i32
    %0 = arith.cmpi eq, %arg2, %c0_i32 : i32
    %1 = arith.extui %0 : i1 to i32
    %c0_i32_0 = arith.constant 0 : i32
    %2 = arith.cmpi ne, %1, %c0_i32_0 : i32
    scf.if %2 {
      %cst_57 = arith.constant 0.000000e+00 : f32
      %113 = vector.broadcast %cst_57 : f32 to vector<1x1x1x1xf32>
      %c0_58 = arith.constant 0 : index
      %c0_59 = arith.constant 0 : index
      %c0_60 = arith.constant 0 : index
      %c0_61 = arith.constant 0 : index
      %114 = vector.load %arg5[%c0_58, %c0_59, %c0_60, %c0_61] : memref<1x1x1x1xf32, #tpu.memory_space<vmem>>, vector<1x1x1x1xf32>
      tpu.vector_store %arg5[%c0_58, %c0_59, %c0_60, %c0_61], %113 {strides = array<i32>} : memref<1x1x1x1xf32, #tpu.memory_space<vmem>>, vector<1x1x1x1xf32>,
      %cst_62 = arith.constant 0.000000e+00 : f32
      %115 = vector.broadcast %cst_62 : f32 to vector<1x1x8x1xf32>
      %c0_63 = arith.constant 0 : index
      %c0_64 = arith.constant 0 : index
      %c0_65 = arith.constant 0 : index
      %c0_66 = arith.constant 0 : index
      %116 = vector.load %arg6[%c0_63, %c0_64, %c0_65, %c0_66] : memref<1x1x8x1xf32, #tpu.memory_space<vmem>>, vector<1x1x8x1xf32>
      tpu.vector_store %arg6[%c0_63, %c0_64, %c0_65, %c0_66], %115 {strides = array<i32>} : memref<1x1x8x1xf32, #tpu.memory_space<vmem>>, vector<1x1x8x1xf32>,
      %cst_67 = arith.constant 0.000000e+00 : f32
      %117 = vector.broadcast %cst_67 : f32 to vector<1x1x8x1xf32>
      %c0_68 = arith.constant 0 : index
      %c0_69 = arith.constant 0 : index
      %c0_70 = arith.constant 0 : index
      %c0_71 = arith.constant 0 : index
      %118 = vector.load %arg7[%c0_68, %c0_69, %c0_70, %c0_71] : memref<1x1x8x1xf32, #tpu.memory_space<vmem>>, vector<1x1x8x1xf32>
      tpu.vector_store %arg7[%c0_68, %c0_69, %c0_70, %c0_71], %117 {strides = array<i32>} : memref<1x1x8x1xf32, #tpu.memory_space<vmem>>, vector<1x1x8x1xf32>,
      %cst_72 = arith.constant 0.000000e+00 : f32
      %119 = vector.broadcast %cst_72 : f32 to vector<1x1x8x1xf32>
      %c0_73 = arith.constant 0 : index
      %c0_74 = arith.constant 0 : index
      %c0_75 = arith.constant 0 : index
      %c0_76 = arith.constant 0 : index
      %120 = vector.load %arg8[%c0_73, %c0_74, %c0_75, %c0_76] : memref<1x1x8x1xf32, #tpu.memory_space<vmem>>, vector<1x1x8x1xf32>
      tpu.vector_store %arg8[%c0_73, %c0_74, %c0_75, %c0_76], %119 {strides = array<i32>} : memref<1x1x8x1xf32, #tpu.memory_space<vmem>>, vector<1x1x8x1xf32>,
    } else {
    }
    %c0 = arith.constant 0 : index
    %c0_1 = arith.constant 0 : index
    %c0_2 = arith.constant 0 : index
    %3 = vector.load %arg3[%c0, %c0_1, %c0_2] : memref<1x8x256xf32, #tpu.memory_space<vmem>>, vector<1x8x256xf32>
    %4 = vector.shape_cast %3 : vector<1x8x256xf32> to vector<8x256xf32>
    %c0_3 = arith.constant 0 : index
    %c0_4 = arith.constant 0 : index
    %c0_5 = arith.constant 0 : index
    %5 = vector.load %arg4[%c0_3, %c0_4, %c0_5] : memref<1x1x256xi32, #tpu.memory_space<vmem>>, vector<1x1x256xi32>
    %6 = vector.shape_cast %5 : vector<1x1x256xi32> to vector<1x256xi32>
    %c-1_i32 = arith.constant -1 : i32
    %7 = vector.broadcast %c-1_i32 : i32 to vector<1x256xi32>
    %8 = arith.cmpi ne, %6, %7 : vector<1x256xi32>
    %9 = arith.extui %8 : vector<1x256xi1> to vector<1x256xi32>
    %10 = arith.sitofp %9 : vector<1x256xi32> to vector<1x256xf32>
    %cst = arith.constant dense<0xFF800000> : vector<256xf32>
    %11 = vector.multi_reduction <maximumf>, %4, %cst [0] : vector<8x256xf32> to vector<256xf32>
    %12 = vector.shape_cast %11 : vector<256xf32> to vector<1x256xf32>
    %13 = vector.broadcast %12 : vector<1x256xf32> to vector<8x256xf32>
    %14 = arith.subf %4, %13 : vector<8x256xf32>
    %15 = math.exp %14 : vector<8x256xf32>
    %cst_6 = arith.constant dense<0.000000e+00> : vector<256xf32>
    %16 = vector.multi_reduction <add>, %15, %cst_6 [0] : vector<8x256xf32> to vector<256xf32>
    %17 = vector.shape_cast %16 : vector<256xf32> to vector<1x256xf32>
    %c0_i32_7 = arith.constant 0 : i32
    %c7_i32 = arith.constant 7 : i32
    %18 = vector.broadcast %c0_i32_7 : i32 to vector<1x256xi32>
    %19 = arith.maxsi %18, %6 : vector<1x256xi32>
    %20 = vector.broadcast %c7_i32 : i32 to vector<1x256xi32>
    %21 = arith.minsi %20, %19 : vector<1x256xi32>
    %22 = tpu.iota {dimensions = array<i32: 0>} : vector<8x256xi32>
    %23 = vector.broadcast %21 : vector<1x256xi32> to vector<8x256xi32>
    %24 = arith.cmpi eq, %22, %23 : vector<8x256xi32>
    %25 = arith.extui %24 : vector<8x256xi1> to vector<8x256xi32>
    %26 = arith.sitofp %25 : vector<8x256xi32> to vector<8x256xf32>
    %27 = arith.mulf %26, %4 : vector<8x256xf32>
    %cst_8 = arith.constant dense<0.000000e+00> : vector<256xf32>
    %28 = vector.multi_reduction <add>, %27, %cst_8 [0] : vector<8x256xf32> to vector<256xf32>
    %29 = vector.shape_cast %28 : vector<256xf32> to vector<1x256xf32>
    %30 = math.log %17 : vector<1x256xf32>
    %31 = arith.addf %12, %30 : vector<1x256xf32>
    %32 = arith.subf %31, %29 : vector<1x256xf32>
    %cst_9 = arith.constant 0.000000e+00 : f32
    %33 = vector.broadcast %cst_9 : f32 to vector<1x256xf32>
    %34 = arith.select %8, %32, %33 : vector<1x256xi1>, vector<1x256xf32>
    %cst_10 = arith.constant 0.000000e+00 : f32
    %35 = vector.broadcast %cst_10 : f32 to vector<1x256xf32>
    %36 = arith.subf %35, %34 : vector<1x256xf32>
    %37 = math.exp %36 : vector<1x256xf32>
    %cst_11 = arith.constant 1.000000e+01 : f32
    %38 = vector.broadcast %cst_11 : f32 to vector<1x256xf32>
    %c1_i32 = arith.constant 1 : i32
    %39 = vector.broadcast %c1_i32 : i32 to vector<1x256xi32>
    %40 = arith.cmpi eq, %21, %39 : vector<1x256xi32>
    %cst_12 = arith.constant 8.000000e+00 : f32
    %41 = vector.broadcast %cst_12 : f32 to vector<1x256xf32>
    %42 = arith.select %40, %41, %38 : vector<1x256xi1>, vector<1x256xf32>
    %c2_i32 = arith.constant 2 : i32
    %43 = vector.broadcast %c2_i32 : i32 to vector<1x256xi32>
    %44 = arith.cmpi eq, %21, %43 : vector<1x256xi32>
    %cst_13 = arith.constant 2.500000e+01 : f32
    %45 = vector.broadcast %cst_13 : f32 to vector<1x256xf32>
    %46 = arith.select %44, %45, %42 : vector<1x256xi1>, vector<1x256xf32>
    %c3_i32 = arith.constant 3 : i32
    %47 = vector.broadcast %c3_i32 : i32 to vector<1x256xi32>
    %48 = arith.cmpi eq, %21, %47 : vector<1x256xi32>
    %cst_14 = arith.constant 5.000000e+01 : f32
    %49 = vector.broadcast %cst_14 : f32 to vector<1x256xf32>
    %50 = arith.select %48, %49, %46 : vector<1x256xi1>, vector<1x256xf32>
    %c4_i32 = arith.constant 4 : i32
    %51 = vector.broadcast %c4_i32 : i32 to vector<1x256xi32>
    %52 = arith.cmpi eq, %21, %51 : vector<1x256xi32>
    %cst_15 = arith.constant 5.000000e+01 : f32
    %53 = vector.broadcast %cst_15 : f32 to vector<1x256xf32>
    %54 = arith.select %52, %53, %50 : vector<1x256xi1>, vector<1x256xf32>
    %c5_i32 = arith.constant 5 : i32
    %55 = vector.broadcast %c5_i32 : i32 to vector<1x256xi32>
    %56 = arith.cmpi eq, %21, %55 : vector<1x256xi32>
    %cst_16 = arith.constant 1.000000e+00 : f32
    %57 = vector.broadcast %cst_16 : f32 to vector<1x256xf32>
    %58 = arith.select %56, %57, %54 : vector<1x256xi1>, vector<1x256xf32>
    %c6_i32 = arith.constant 6 : i32
    %59 = vector.broadcast %c6_i32 : i32 to vector<1x256xi32>
    %60 = arith.cmpi eq, %21, %59 : vector<1x256xi32>
    %cst_17 = arith.constant 1.000000e+00 : f32
    %61 = vector.broadcast %cst_17 : f32 to vector<1x256xf32>
    %62 = arith.select %60, %61, %58 : vector<1x256xi1>, vector<1x256xf32>
    %c7_i32_18 = arith.constant 7 : i32
    %63 = vector.broadcast %c7_i32_18 : i32 to vector<1x256xi32>
    %64 = arith.cmpi eq, %21, %63 : vector<1x256xi32>
    %cst_19 = arith.constant 1.000000e+01 : f32
    %65 = vector.broadcast %cst_19 : f32 to vector<1x256xf32>
    %66 = arith.select %64, %65, %62 : vector<1x256xi1>, vector<1x256xf32>
    %cst_20 = arith.constant 1.000000e+00 : f32
    %67 = vector.broadcast %cst_20 : f32 to vector<1x256xf32>
    %68 = arith.subf %67, %37 : vector<1x256xf32>
    %69 = arith.mulf %66, %68 : vector<1x256xf32>
    %70 = arith.mulf %69, %68 : vector<1x256xf32>
    %71 = arith.mulf %70, %34 : vector<1x256xf32>
    %cst_21 = arith.constant dense<0.000000e+00> : vector<1xf32>
    %72 = vector.multi_reduction <add>, %71, %cst_21 [1] : vector<1x256xf32> to vector<1xf32>
    %73 = vector.shape_cast %72 : vector<1xf32> to vector<1x1xf32>
    %74 = tpu.reciprocal %17 : vector<1x256xf32> -> vector<1x256xf32>
    %75 = arith.mulf %74, %10 : vector<1x256xf32>
    %76 = arith.mulf %37, %10 : vector<1x256xf32>
    %77 = vector.broadcast %76 : vector<1x256xf32> to vector<8x256xf32>
    %78 = arith.mulf %26, %77 : vector<8x256xf32>
    %cst_22 = arith.constant dense<0.000000e+00> : vector<8xf32>
    %79 = vector.multi_reduction <add>, %78, %cst_22 [1] : vector<8x256xf32> to vector<8xf32>
    %80 = vector.shape_cast %79 : vector<8xf32> to vector<8x1xf32>
    %81 = vector.broadcast %75 : vector<1x256xf32> to vector<8x256xf32>
    %82 = arith.mulf %15, %81 : vector<8x256xf32>
    %cst_23 = arith.constant dense<0.000000e+00> : vector<8xf32>
    %83 = vector.multi_reduction <add>, %82, %cst_23 [1] : vector<8x256xf32> to vector<8xf32>
    %84 = vector.shape_cast %83 : vector<8xf32> to vector<8x1xf32>
    %85 = vector.broadcast %10 : vector<1x256xf32> to vector<8x256xf32>
    %86 = arith.mulf %26, %85 : vector<8x256xf32>
    %cst_24 = arith.constant dense<0.000000e+00> : vector<8xf32>
    %87 = vector.multi_reduction <add>, %86, %cst_24 [1] : vector<8x256xf32> to vector<8xf32>
    %88 = vector.shape_cast %87 : vector<8xf32> to vector<8x1xf32>
    %c0_25 = arith.constant 0 : index
    %c0_26 = arith.constant 0 : index
    %c0_27 = arith.constant 0 : index
    %c0_28 = arith.constant 0 : index
    %89 = vector.load %arg5[%c0_25, %c0_26, %c0_27, %c0_28] : memref<1x1x1x1xf32, #tpu.memory_space<vmem>>, vector<1x1x1x1xf32>
    %90 = vector.shape_cast %89 : vector<1x1x1x1xf32> to vector<1x1xf32>
    %91 = arith.addf %90, %73 : vector<1x1xf32>
    %c0_29 = arith.constant 0 : index
    %c0_30 = arith.constant 0 : index
    %c0_31 = arith.constant 0 : index
    %c0_32 = arith.constant 0 : index
    %92 = vector.load %arg5[%c0_29, %c0_30, %c0_31, %c0_32] : memref<1x1x1x1xf32, #tpu.memory_space<vmem>>, vector<1x1x1x1xf32>
    %93 = vector.shape_cast %92 : vector<1x1x1x1xf32> to vector<1x1xf32>
    %94 = vector.shape_cast %91 : vector<1x1xf32> to vector<1x1x1x1xf32>
    tpu.vector_store %arg5[%c0_29, %c0_30, %c0_31, %c0_32], %94 {strides = array<i32>} : memref<1x1x1x1xf32, #tpu.memory_space<vmem>>, vector<1x1x1x1xf32>,
    %c0_33 = arith.constant 0 : index
    %c0_34 = arith.constant 0 : index
    %c0_35 = arith.constant 0 : index
    %c0_36 = arith.constant 0 : index
    %95 = vector.load %arg6[%c0_33, %c0_34, %c0_35, %c0_36] : memref<1x1x8x1xf32, #tpu.memory_space<vmem>>, vector<1x1x8x1xf32>
    %96 = vector.shape_cast %95 : vector<1x1x8x1xf32> to vector<8x1xf32>
    %97 = arith.addf %96, %80 : vector<8x1xf32>
    %c0_37 = arith.constant 0 : index
    %c0_38 = arith.constant 0 : index
    %c0_39 = arith.constant 0 : index
    %c0_40 = arith.constant 0 : index
    %98 = vector.load %arg6[%c0_37, %c0_38, %c0_39, %c0_40] : memref<1x1x8x1xf32, #tpu.memory_space<vmem>>, vector<1x1x8x1xf32>
    %99 = vector.shape_cast %98 : vector<1x1x8x1xf32> to vector<8x1xf32>
    %100 = vector.shape_cast %97 : vector<8x1xf32> to vector<1x1x8x1xf32>
    tpu.vector_store %arg6[%c0_37, %c0_38, %c0_39, %c0_40], %100 {strides = array<i32>} : memref<1x1x8x1xf32, #tpu.memory_space<vmem>>, vector<1x1x8x1xf32>,
    %c0_41 = arith.constant 0 : index
    %c0_42 = arith.constant 0 : index
    %c0_43 = arith.constant 0 : index
    %c0_44 = arith.constant 0 : index
    %101 = vector.load %arg7[%c0_41, %c0_42, %c0_43, %c0_44] : memref<1x1x8x1xf32, #tpu.memory_space<vmem>>, vector<1x1x8x1xf32>
    %102 = vector.shape_cast %101 : vector<1x1x8x1xf32> to vector<8x1xf32>
    %103 = arith.addf %102, %84 : vector<8x1xf32>
    %c0_45 = arith.constant 0 : index
    %c0_46 = arith.constant 0 : index
    %c0_47 = arith.constant 0 : index
    %c0_48 = arith.constant 0 : index
    %104 = vector.load %arg7[%c0_45, %c0_46, %c0_47, %c0_48] : memref<1x1x8x1xf32, #tpu.memory_space<vmem>>, vector<1x1x8x1xf32>
    %105 = vector.shape_cast %104 : vector<1x1x8x1xf32> to vector<8x1xf32>
    %106 = vector.shape_cast %103 : vector<8x1xf32> to vector<1x1x8x1xf32>
    tpu.vector_store %arg7[%c0_45, %c0_46, %c0_47, %c0_48], %106 {strides = array<i32>} : memref<1x1x8x1xf32, #tpu.memory_space<vmem>>, vector<1x1x8x1xf32>,
    %c0_49 = arith.constant 0 : index
    %c0_50 = arith.constant 0 : index
    %c0_51 = arith.constant 0 : index
    %c0_52 = arith.constant 0 : index
    %107 = vector.load %arg8[%c0_49, %c0_50, %c0_51, %c0_52] : memref<1x1x8x1xf32, #tpu.memory_space<vmem>>, vector<1x1x8x1xf32>
    %108 = vector.shape_cast %107 : vector<1x1x8x1xf32> to vector<8x1xf32>
    %109 = arith.addf %108, %88 : vector<8x1xf32>
    %c0_53 = arith.constant 0 : index
    %c0_54 = arith.constant 0 : index
    %c0_55 = arith.constant 0 : index
    %c0_56 = arith.constant 0 : index
    %110 = vector.load %arg8[%c0_53, %c0_54, %c0_55, %c0_56] : memref<1x1x8x1xf32, #tpu.memory_space<vmem>>, vector<1x1x8x1xf32>
    %111 = vector.shape_cast %110 : vector<1x1x8x1xf32> to vector<8x1xf32>
    %112 = vector.shape_cast %109 : vector<8x1xf32> to vector<1x1x8x1xf32>
    tpu.vector_store %arg8[%c0_53, %c0_54, %c0_55, %c0_56], %112 {strides = array<i32>} : memref<1x1x8x1xf32, #tpu.memory_space<vmem>>, vector<1x1x8x1xf32>,
    return
  }
  func.func @transform_0(%arg0: i32, %arg1: i32, %arg2: i32) -> (i32, i32, i32) {
    %c1_i32 = arith.constant 1 : i32
    %0 = arith.muli %arg1, %c1_i32 : i32
    %1 = arith.addi %0, %arg2 : i32
    %c0_i32 = arith.constant 0 : i32
    %2 = arith.minsi %1, %c0_i32 : i32
    %c0_i32_0 = arith.constant 0 : i32
    %c0_i32_1 = arith.constant 0 : i32
    return %arg0, %c0_i32_0, %2 : i32, i32, i32
  }
  func.func @transform_1(%arg0: i32, %arg1: i32, %arg2: i32) -> (i32, i32, i32) {
    %c1_i32 = arith.constant 1 : i32
    %0 = arith.muli %arg1, %c1_i32 : i32
    %1 = arith.addi %0, %arg2 : i32
    %c0_i32 = arith.constant 0 : i32
    %2 = arith.minsi %1, %c0_i32 : i32
    %c0_i32_0 = arith.constant 0 : i32
    %c0_i32_1 = arith.constant 0 : i32
    return %arg0, %c0_i32_0, %2 : i32, i32, i32
  }
  func.func @transform_2(%arg0: i32, %arg1: i32, %arg2: i32) -> (i32, i32, i32, i32) {
    %c0_i32 = arith.constant 0 : i32
    %c0_i32_0 = arith.constant 0 : i32
    %c0_i32_1 = arith.constant 0 : i32
    return %arg0, %arg1, %c0_i32, %c0_i32_0 : i32, i32, i32, i32
  }
  func.func @transform_3(%arg0: i32, %arg1: i32, %arg2: i32) -> (i32, i32, i32, i32) {
    %c0_i32 = arith.constant 0 : i32
    %c0_i32_0 = arith.constant 0 : i32
    %c0_i32_1 = arith.constant 0 : i32
    return %arg0, %arg1, %c0_i32, %c0_i32_0 : i32, i32, i32, i32
  }
  func.func @transform_4(%arg0: i32, %arg1: i32, %arg2: i32) -> (i32, i32, i32, i32) {
    %c0_i32 = arith.constant 0 : i32
    %c0_i32_0 = arith.constant 0 : i32
    %c0_i32_1 = arith.constant 0 : i32
    return %arg0, %arg1, %c0_i32, %c0_i32_0 : i32, i32, i32, i32
  }
  func.func @transform_5(%arg0: i32, %arg1: i32, %arg2: i32) -> (i32, i32, i32, i32) {
    %c0_i32 = arith.constant 0 : i32
    %c0_i32_0 = arith.constant 0 : i32
    %c0_i32_1 = arith.constant 0 : i32
    return %arg0, %arg1, %c0_i32, %c0_i32_0 : i32, i32, i32, i32
  }
}

</mosaic_0001>

<llo_original>
// kernel: combined_loss.1
$region0: #{combined_loss.1}
  #allocation0 [shape = 'u32[]', space=smem, size = 0x4, offset = 0x4, fixed_abs, tag = 'smem constant byte address 0x4 - core index']
  #allocation1 [shape = 'u32[144,128]{1,0:T(1,128)}', space=vmem, size = 0x12000, scoped, tag = 'internal scratch']
  %s0 = inlined_call_operand.vmem [shape: f32[2,8,256], index: 0, kind: input, shape index: {}]
  %s1 = inlined_call_operand.vmem [shape: s32[2,1,256], index: 1, kind: input, shape index: {}]
  %s2 = inlined_call_operand.vmem [shape: f32[2,1,1,1], index: 2, kind: output, shape index: {0}]
  %s3 = inlined_call_operand.vmem [shape: f32[2,1,8,1], index: 3, kind: output, shape index: {1}]
  %s4 = inlined_call_operand.vmem [shape: f32[2,1,8,1], index: 4, kind: output, shape index: {2}]
  %s5 = inlined_call_operand.vmem [shape: f32[2,1,8,1], index: 5, kind: output, shape index: {3}]
  %6 = xla_tuple %s2, %s3, %s4, %s5
  %s7 = sld [smem:[#allocation0]]
  $region69: #{combined_loss.1} parent=0
    _
  %s9 = ssub.s32 1, %s7
  %s10 = scalar_select 0, %s9, %s7
  loop: start=0, step=1, limit=4
  $region2: #{combined_loss.1} parent=0 // loop_pre_header
    _
  $region3: #{combined_loss.1} parent=0 // loop_header
    %s12 = sphi 0, %s16
    %p13 = scmp.ge.s32.totalorder %s12, 4
    %s19 = sphi 0, %s38
    %s20 = sphi 0, %s34
    %s21 = sphi 0, %s30
    %s22 = sphi 0, %s19
    %s23 = sphi 0, %s20
    %s24 = sphi 0, %s21
    %s25 = sphi 0, %s22
    %s26 = sphi 0, %s23
    %s27 = sphi 0, %s24
    %s49 = sphi 0, %s51
    %s52 = sphi 0, %s49
    %s53 = sphi 0, %s52
    %s69 = sphi 0, %s53
    %s83 = sphi 0, %s85
    %s86 = sphi 0, %s83
    %s87 = sphi 0, %s86
    %s103 = sphi 0, %s87
    %s111 = sphi 0, %s113
    %s114 = sphi 0, %s111
    %s115 = sphi 0, %s114
    %s131 = sphi 0, %s115
    %s139 = sphi 0, %s141
    %s142 = sphi 0, %s139
    %s143 = sphi 0, %s142
    %s159 = sphi 0, %s143
    %s167 = sphi 0, %s169
    %s170 = sphi 0, %s167
    %s171 = sphi 0, %s170
    %s187 = sphi 0, %s171
    %s195 = sphi 0, %s197
    %s198 = sphi 0, %s195
    %s199 = sphi 0, %s198
    %s215 = sphi 0, %s199
  $region4: #{combined_loss.1} parent=0 // loop_header_branch
    %15 = sbr.rel (%p13) target = $region8
  $region5: #{combined_loss.1} parent=0 // loop_body
    %s17 = ssub.s32 %s12, 1
    %s18 = ssub.s32 %s12, 2
    %s28 = sadd.s32 1, %s21
    %p29 = scmp.ge.s32.totalorder %s28, 1
    %s30 = scalar_select %p29, 0, %s28
    %s31 = sadd.s32 1, %s20
    %s32 = scalar_select %p29, %s31, %s20
    %p33 = scmp.ge.s32.totalorder %s32, 1
    %s34 = scalar_select %p33, 0, %s32
    %s35 = sadd.s32 1, %s19
    %s36 = scalar_select %p33, %s35, %s19
    %p37 = scmp.ge.s32.totalorder %s36, 2
    %s38 = scalar_select %p37, 0, %s36
    %s39 = sadd.s32 %s20, %s21
    %p40 = scmp.lt.s32.totalorder %s39, 0
    %s41 = scalar_select %p40, %s39, 0
    %s42 = sadd.s32 %s34, %s30
    %p43 = scmp.lt.s32.totalorder %s42, 0
    %s44 = scalar_select %p43, %s42, 0
    %s45 = ssub.s32 %s19, %s38
    %s46 = ssub.s32 %s41, %s44
    %s47 = sor.u32 %s45, %s46
    %p48 = scmp.eq.s32.totalorder %s47, 0
    %s50 = sadd.s32 %s49, 1
    %s51 = scalar_select %p48, %s49, %s50
    %p54 = pneg %p48
    %p55 = scmp.eq.s32.totalorder %s12, 1
    %p56 = por %p54, %p55
    %p57 = scmp.ne.s32.totalorder %s49, %s52
    %p58 = scmp.eq.s32.totalorder %s12, 0
    %p59 = por %p57, %p58
    %p60 = scmp.ne.s32.totalorder %s49, %s52
    %p61 = scmp.eq.s32.totalorder %s17, 1
    %p62 = por %p60, %p61
    %p63 = scmp.ne.s32.totalorder %s52, %s53
    %p64 = scmp.eq.s32.totalorder %s17, 0
    %p65 = por %p63, %p64
    %p66 = scmp.ne.s32.totalorder %s52, %s53
    %p67 = scmp.eq.s32.totalorder %s18, 1
    %p68 = por %p66, %p67
    %p70 = scmp.ne.s32.totalorder %s53, %s69
    %p71 = scmp.eq.s32.totalorder %s18, 0
    %p72 = por %p70, %p71
    %s73 = sadd.s32 %s20, %s21
    %p74 = scmp.lt.s32.totalorder %s73, 0
    %s75 = scalar_select %p74, %s73, 0
    %s76 = sadd.s32 %s34, %s30
    %p77 = scmp.lt.s32.totalorder %s76, 0
    %s78 = scalar_select %p77, %s76, 0
    %s79 = ssub.s32 %s19, %s38
    %s80 = ssub.s32 %s75, %s78
    %s81 = sor.u32 %s79, %s80
    %p82 = scmp.eq.s32.totalorder %s81, 0
    %s84 = sadd.s32 %s83, 1
    %s85 = scalar_select %p82, %s83, %s84
    %p88 = pneg %p82
    %p89 = scmp.eq.s32.totalorder %s12, 1
    %p90 = por %p88, %p89
    %p91 = scmp.ne.s32.totalorder %s83, %s86
    %p92 = scmp.eq.s32.totalorder %s12, 0
    %p93 = por %p91, %p92
    %p94 = scmp.ne.s32.totalorder %s83, %s86
    %p95 = scmp.eq.s32.totalorder %s17, 1
    %p96 = por %p94, %p95
    %p97 = scmp.ne.s32.totalorder %s86, %s87
    %p98 = scmp.eq.s32.totalorder %s17, 0
    %p99 = por %p97, %p98
    %p100 = scmp.ne.s32.totalorder %s86, %s87
    %p101 = scmp.eq.s32.totalorder %s18, 1
    %p102 = por %p100, %p101
    %p104 = scmp.ne.s32.totalorder %s87, %s103
    %p105 = scmp.eq.s32.totalorder %s18, 0
    %p106 = por %p104, %p105
    %s107 = ssub.s32 %s19, %s38
    %s108 = ssub.s32 %s20, %s34
    %s109 = sor.u32 %s107, %s108
    %p110 = scmp.eq.s32.totalorder %s109, 0
    %s112 = sadd.s32 %s111, 1
    %s113 = scalar_select %p110, %s111, %s112
    %p116 = pneg %p110
    %p117 = scmp.eq.s32.totalorder %s12, 1
    %p118 = por %p116, %p117
    %p119 = scmp.ne.s32.totalorder %s111, %s114
    %p120 = scmp.eq.s32.totalorder %s12, 0
    %p121 = por %p119, %p120
    %p122 = scmp.ne.s32.totalorder %s111, %s114
    %p123 = scmp.eq.s32.totalorder %s17, 1
    %p124 = por %p122, %p123
    %p125 = scmp.ne.s32.totalorder %s114, %s115
    %p126 = scmp.eq.s32.totalorder %s17, 0
    %p127 = por %p125, %p126
    %p128 = scmp.ne.s32.totalorder %s114, %s115
    %p129 = scmp.eq.s32.totalorder %s18, 1
    %p130 = por %p128, %p129
    %p132 = scmp.ne.s32.totalorder %s115, %s131
    %p133 = scmp.eq.s32.totalorder %s18, 0
    %p134 = por %p132, %p133
    %s135 = ssub.s32 %s19, %s38
    %s136 = ssub.s32 %s20, %s34
    %s137 = sor.u32 %s135, %s136
    %p138 = scmp.eq.s32.totalorder %s137, 0
    %s140 = sadd.s32 %s139, 1
    %s141 = scalar_select %p138, %s139, %s140
    %p144 = pneg %p138
    %p145 = scmp.eq.s32.totalorder %s12, 1
    %p146 = por %p144, %p145
    %p147 = scmp.ne.s32.totalorder %s139, %s142
    %p148 = scmp.eq.s32.totalorder %s12, 0
    %p149 = por %p147, %p148
    %p150 = scmp.ne.s32.totalorder %s139, %s142
    %p151 = scmp.eq.s32.totalorder %s17, 1
    %p152 = por %p150, %p151
    %p153 = scmp.ne.s32.totalorder %s142, %s143
    %p154 = scmp.eq.s32.totalorder %s17, 0
    %p155 = por %p153, %p154
    %p156 = scmp.ne.s32.totalorder %s142, %s143
    %p157 = scmp.eq.s32.totalorder %s18, 1
    %p158 = por %p156, %p157
    %p160 = scmp.ne.s32.totalorder %s143, %s159
    %p161 = scmp.eq.s32.totalorder %s18, 0
    %p162 = por %p160, %p161
    %s163 = ssub.s32 %s19, %s38
    %s164 = ssub.s32 %s20, %s34
    %s165 = sor.u32 %s163, %s164
    %p166 = scmp.eq.s32.totalorder %s165, 0
    %s168 = sadd.s32 %s167, 1
    %s169 = scalar_select %p166, %s167, %s168
    %p172 = pneg %p166
    %p173 = scmp.eq.s32.totalorder %s12, 1
    %p174 = por %p172, %p173
    %p175 = scmp.ne.s32.totalorder %s167, %s170
    %p176 = scmp.eq.s32.totalorder %s12, 0
    %p177 = por %p175, %p176
    %p178 = scmp.ne.s32.totalorder %s167, %s170
    %p179 = scmp.eq.s32.totalorder %s17, 1
    %p180 = por %p178, %p179
    %p181 = scmp.ne.s32.totalorder %s170, %s171
    %p182 = scmp.eq.s32.totalorder %s17, 0
    %p183 = por %p181, %p182
    %p184 = scmp.ne.s32.totalorder %s170, %s171
    %p185 = scmp.eq.s32.totalorder %s18, 1
    %p186 = por %p184, %p185
    %p188 = scmp.ne.s32.totalorder %s171, %s187
    %p189 = scmp.eq.s32.totalorder %s18, 0
    %p190 = por %p188, %p189
    %s191 = ssub.s32 %s19, %s38
    %s192 = ssub.s32 %s20, %s34
    %s193 = sor.u32 %s191, %s192
    %p194 = scmp.eq.s32.totalorder %s193, 0
    %s196 = sadd.s32 %s195, 1
    %s197 = scalar_select %p194, %s195, %s196
    %p200 = pneg %p194
    %p201 = scmp.eq.s32.totalorder %s12, 1
    %p202 = por %p200, %p201
    %p203 = scmp.ne.s32.totalorder %s195, %s198
    %p204 = scmp.eq.s32.totalorder %s12, 0
    %p205 = por %p203, %p204
    %p206 = scmp.ne.s32.totalorder %s195, %s198
    %p207 = scmp.eq.s32.totalorder %s17, 1
    %p208 = por %p206, %p207
    %p209 = scmp.ne.s32.totalorder %s198, %s199
    %p210 = scmp.eq.s32.totalorder %s17, 0
    %p211 = por %p209, %p210
    %p212 = scmp.ne.s32.totalorder %s198, %s199
    %p213 = scmp.eq.s32.totalorder %s18, 1
    %p214 = por %p212, %p213
    %p216 = scmp.ne.s32.totalorder %s199, %s215
    %p217 = scmp.eq.s32.totalorder %s18, 0
    %p218 = por %p216, %p217
    %p219 = scmp.le.s32.totalorder 1, %s12
    %p220 = scmp.lt.s32.totalorder %s12, 3
    %p221 = pnand %p219, %p220
    %p222 = pneg %p221
    // Predicated region
    $region9: #{combined_loss.1} parent=5 // pred_check
      _
    $region10: #{combined_loss.1} parent=5 // pred_check_branch
      %224 = sbr.rel (%p221) target = $region12
    $region11: #{combined_loss.1} parent=5 // pred_region
      %s225 = ssub.s32 %s12, 1
    $region12: #{combined_loss.1} parent=5 // pred_fallthru
      _
    %p226 = scmp.lt.s32.totalorder %s12, 2
    // Predicated region
    $region13: #{combined_loss.1} parent=5 // pred_check
      %p227 = pneg %p226
    $region14: #{combined_loss.1} parent=5 // pred_check_branch
      %229 = sbr.rel (%p227) target = $region16
    $region15: #{combined_loss.1} parent=5 // pred_region
      // Predicated region
      $region17: #{combined_loss.1} parent=15 // pred_check
        %p230 = pneg %p59
      $region18: #{combined_loss.1} parent=15 // pred_check_branch
        %232 = sbr.rel (%p230) target = $region20
      $region19: #{combined_loss.1} parent=15 // pred_region
        %s233 = sadd.s32 %s20, %s21
        %p234 = scmp.lt.s32.totalorder %s233, 0
        %s235 = scalar_select %p234, %s233, 0
        %s236 = smul.u32 2, %s235
        %p237 = scmp.lt.s32.totalorder %s19, 1
        %s238 = scalar_select %p237, %s19, 1
        %p239 = scmp.lt.s32.totalorder %s236, 1
        %s240 = scalar_select %p239, %s236, 1
        %s241 = smul.addr %s238, 2
        %s242 = sadd.s32 %s240, %s241
        %s243 = smul.addr %s242, 8
        %s244 = scalar_lea.vmem %s0, %s243
        %s245 = sadd.s32 %s20, %s21
        %p246 = scmp.lt.s32.totalorder %s245, 0
        %s247 = scalar_select %p246, %s245, 0
        %s248 = smul.u32 2, %s247
      $region20: #{combined_loss.1} parent=15 // pred_fallthru
        _
      // Predicated region
      $region21: #{combined_loss.1} parent=15 // pred_check
        %p249 = pneg %p93
      $region22: #{combined_loss.1} parent=15 // pred_check_branch
        %251 = sbr.rel (%p249) target = $region24
      $region23: #{combined_loss.1} parent=15 // pred_region
        %s252 = sadd.s32 %s20, %s21
        %p253 = scmp.lt.s32.totalorder %s252, 0
        %s254 = scalar_select %p253, %s252, 0
        %s255 = smul.u32 2, %s254
        %p256 = scmp.lt.s32.totalorder %s19, 1
        %s257 = scalar_select %p256, %s19, 1
        %p258 = scmp.lt.s32.totalorder %s255, 1
        %s259 = scalar_select %p258, %s255, 1
        %s260 = smul.addr %s257, 2
        %s261 = sadd.s32 %s259, %s260
        %s262 = scalar_lea.vmem %s1, %s261
        %s263 = sadd.s32 %s20, %s21
        %p264 = scmp.lt.s32.totalorder %s263, 0
        %s265 = scalar_select %p264, %s263, 0
        %s266 = smul.u32 2, %s265
      $region24: #{combined_loss.1} parent=15 // pred_fallthru
        _
    $region16: #{combined_loss.1} parent=5 // pred_fallthru
      _
    %p267 = scmp.le.s32.totalorder 1, %s12
    %p268 = scmp.lt.s32.totalorder %s12, 3
    %p269 = pnand %p267, %p268
    %p270 = pneg %p269
    // Predicated region
    $region25: #{combined_loss.1} parent=5 // pred_check
      _
    $region26: #{combined_loss.1} parent=5 // pred_check_branch
      %272 = sbr.rel (%p269) target = $region28
    $region27: #{combined_loss.1} parent=5 // pred_region
      %s273 = ssub.s32 %s12, 1
      %s274 = sadd.s32 %s23, %s24
      %p275 = scmp.lt.s32.totalorder %s274, 0
      %s276 = scalar_select %p275, %s274, 0
      %s277 = smul.u32 2, %s276
      %p278 = scmp.lt.s32.totalorder %s22, 1
      %s279 = scalar_select %p278, %s22, 1
      %p280 = scmp.lt.s32.totalorder %s277, 1
      %s281 = scalar_select %p280, %s277, 1
      %s282 = smul.addr %s279, 2
      %s283 = sadd.s32 %s281, %s282
      %s284 = smul.addr %s283, 8
      %s285 = scalar_lea.vmem %s0, %s284
      %p286 = pneg %p65
      %p287 = pneg %p62
      %s288 = sadd.s32 %s23, %s24
      %p289 = scmp.lt.s32.totalorder %s288, 0
      %s290 = scalar_select %p289, %s288, 0
      %s291 = smul.u32 2, %s290
      %p292 = scmp.lt.s32.totalorder %s22, 1
      %s293 = scalar_select %p292, %s22, 1
      %p294 = scmp.lt.s32.totalorder %s291, 1
      %s295 = scalar_select %p294, %s291, 1
      %s296 = smul.addr %s293, 2
      %s297 = sadd.s32 %s295, %s296
      %s298 = scalar_lea.vmem %s1, %s297
      %p299 = pneg %p99
      %p300 = pneg %p96
      %p301 = pneg %p127
      %p302 = pneg %p124
      %p303 = scmp.lt.s32.totalorder %s22, 1
      %s304 = scalar_select %p303, %s22, 1
      %p305 = scmp.lt.s32.totalorder %s23, 0
      %s306 = scalar_select %p305, %s23, 0
      %s307 = sadd.s32 %s306, %s304
      %s308 = scalar_lea.vmem %s2, %s307
      %p309 = pneg %p155
      %p310 = pneg %p152
      %p311 = scmp.lt.s32.totalorder %s22, 1
      %s312 = scalar_select %p311, %s22, 1
      %p313 = scmp.lt.s32.totalorder %s23, 0
      %s314 = scalar_select %p313, %s23, 0
      %s315 = sadd.s32 %s314, %s312
      %s316 = smul.addr %s315, 8
      %s317 = scalar_lea.vmem %s3, %s316
      %p318 = pneg %p183
      %p319 = pneg %p180
      %p320 = scmp.lt.s32.totalorder %s22, 1
      %s321 = scalar_select %p320, %s22, 1
      %p322 = scmp.lt.s32.totalorder %s23, 0
      %s323 = scalar_select %p322, %s23, 0
      %s324 = sadd.s32 %s323, %s321
      %s325 = smul.addr %s324, 8
      %s326 = scalar_lea.vmem %s4, %s325
      %p327 = pneg %p211
      %p328 = pneg %p208
      %p329 = scmp.lt.s32.totalorder %s22, 1
      %s330 = scalar_select %p329, %s22, 1
      %p331 = scmp.lt.s32.totalorder %s23, 0
      %s332 = scalar_select %p331, %s23, 0
      %s333 = sadd.s32 %s332, %s330
      %s334 = smul.addr %s333, 8
      %s335 = scalar_lea.vmem %s5, %s334
      %s336 = sadd.s32 %s23, %s24
      %p337 = scmp.lt.s32.totalorder %s336, 0
      %s338 = scalar_select %p337, %s336, 0
      %s339 = smul.u32 2, %s338
      %p340 = scmp.lt.s32.totalorder %s22, 1
      %s341 = scalar_select %p340, %s22, 1
      %p342 = scmp.lt.s32.totalorder %s339, 1
      %s343 = scalar_select %p342, %s339, 1
      %s344 = smul.addr %s341, 2
      %s345 = sadd.s32 %s343, %s344
      %s346 = smul.addr %s345, 8
      %s347 = scalar_lea.vmem %s0, %s346
      %s348 = sadd.s32 %s23, %s24
      %p349 = scmp.lt.s32.totalorder %s348, 0
      %s350 = scalar_select %p349, %s348, 0
      %s351 = smul.u32 2, %s350
      %s352 = sadd.s32 %s23, %s24
      %p353 = scmp.lt.s32.totalorder %s352, 0
      %s354 = scalar_select %p353, %s352, 0
      %s355 = smul.u32 2, %s354
      %p356 = scmp.lt.s32.totalorder %s22, 1
      %s357 = scalar_select %p356, %s22, 1
      %p358 = scmp.lt.s32.totalorder %s355, 1
      %s359 = scalar_select %p358, %s355, 1
      %s360 = smul.addr %s357, 2
      %s361 = sadd.s32 %s359, %s360
      %s362 = scalar_lea.vmem %s1, %s361
      %s363 = sadd.s32 %s23, %s24
      %p364 = scmp.lt.s32.totalorder %s363, 0
      %s365 = scalar_select %p364, %s363, 0
      %s366 = smul.u32 2, %s365
      %p367 = scmp.lt.s32.totalorder %s22, 1
      %s368 = scalar_select %p367, %s22, 1
      %p369 = scmp.lt.s32.totalorder %s23, 0
      %s370 = scalar_select %p369, %s23, 0
      %s371 = sadd.s32 %s370, %s368
      %s372 = scalar_lea.vmem %s2, %s371
      %p373 = scmp.lt.s32.totalorder %s22, 1
      %s374 = scalar_select %p373, %s22, 1
      %p375 = scmp.lt.s32.totalorder %s23, 0
      %s376 = scalar_select %p375, %s23, 0
      %s377 = sadd.s32 %s376, %s374
      %s378 = smul.addr %s377, 8
      %s379 = scalar_lea.vmem %s3, %s378
      %p380 = scmp.lt.s32.totalorder %s22, 1
      %s381 = scalar_select %p380, %s22, 1
      %p382 = scmp.lt.s32.totalorder %s23, 0
      %s383 = scalar_select %p382, %s23, 0
      %s384 = sadd.s32 %s383, %s381
      %s385 = smul.addr %s384, 8
      %s386 = scalar_lea.vmem %s4, %s385
      %p387 = scmp.lt.s32.totalorder %s22, 1
      %s388 = scalar_select %p387, %s22, 1
      %p389 = scmp.lt.s32.totalorder %s23, 0
      %s390 = scalar_select %p389, %s23, 0
      %s391 = sadd.s32 %s390, %s388
      %s392 = smul.addr %s391, 8
      %s393 = scalar_lea.vmem %s5, %s392
      %p394 = scmp.eq.s32.totalorder %s24, 0
      // Predicated region
      $region29: #{combined_loss.1} parent=27 // pred_check
        %p395 = pneg %p394
      $region30: #{combined_loss.1} parent=27 // pred_check_branch
        %397 = sbr.rel (%p395) target = $region32
      $region31: #{combined_loss.1} parent=27 // pred_region
        %vm398 = vcmask 0
        %399 = vst.msk [vmem:[%s372] sm:$0x1] %vm398, 0.0
        %vm400 = vcmask 7168
        %401 = vst.msk [vmem:[%s379] sm:$0xff] %vm400, 0.0
        %402 = vst.msk [vmem:[%s386] sm:$0xff] %vm400, 0.0
        %403 = vst.msk [vmem:[%s393] sm:$0xff] %vm400, 0.0
      $region32: #{combined_loss.1} parent=27 // pred_fallthru
        _
      %v404 = vld [vmem:[%s347] sm:$0xff]
      %v405 = vld [vmem:[%s347 + $0x8] sm:$0xff]
      %v406 = vld [vmem:[%s362] sm:$0x3]
      %vm407 = vcmp.ne.s32.totalorder %v406, 4294967295
      %v408 = vsel %vm407, 1, 0
      %v409 = vcvt.s32.f32 %v408
      %v410 = vrot.slane %v404, 4
      %v411 = vmax.f32 %v404, %v410
      %v412 = vrot.slane %v411, 2
      %v413 = vmax.f32 %v411, %v412
      %v414 = vrot.slane %v413, 1
      %v415 = vmax.f32 %v413, %v414
      %v416 = vrot.slane %v405, 4
      %v417 = vmax.f32 %v405, %v416
      %v418 = vrot.slane %v417, 2
      %v419 = vmax.f32 %v417, %v418
      %v420 = vrot.slane %v419, 1
      %v421 = vmax.f32 %v419, %v420
      %v422 = vsub.f32 %v404, %v415
      %v423 = vsub.f32 %v405, %v421
      %v424 = vmul.f32 %v422, 1.442695
      %v425 = vpow.pop %v424
      %v426 = vmul.f32 %v423, 1.442695
      %v427 = vpow.pop %v426
      %v428 = vrot.slane %v425, 4
      %v429 = vadd.f32 %v425, %v428
      %v430 = vrot.slane %v429, 2
      %v431 = vadd.f32 %v429, %v430
      %v432 = vrot.slane %v431, 1
      %v433 = vadd.f32 %v431, %v432
      %v434 = vrot.slane %v427, 4
      %v435 = vadd.f32 %v427, %v434
      %v436 = vrot.slane %v435, 2
      %v437 = vadd.f32 %v435, %v436
      %v438 = vrot.slane %v437, 1
      %v439 = vadd.f32 %v437, %v438
      %vm440 = vcmp.gt.s32.totalorder %v406, 0
      %v441 = vsel %vm440, %v406, 0
      %vm442 = vcmp.lt.s32.totalorder %v441, 7
      %v443 = vsel %vm442, %v441, 7
      %v444 = vlaneseq
      %v445 = vshrl.u32 %v444, 7
      %v446 = vlaneseq
      %v447 = vshrl.u32 %v446, 7
      %v448 = vsub.s32 0, %v447
      %v449 = vrot.slane %v443, %v448
      %v450 = vlaneseq
      %v451 = vshrl.u32 %v450, 7
      %v452 = vsub.s32 1, %v451
      %v453 = vrot.slane %v443, %v452
      %vm454 = vcmp.eq.s32.totalorder %v445, %v449
      %vm455 = vcmp.eq.s32.totalorder %v445, %v453
      %v456 = vsel %vm454, 1, 0
      %v457 = vsel %vm455, 1, 0
      %v458 = vcvt.s32.f32 %v456
      %v459 = vcvt.s32.f32 %v457
      %v460 = vmul.f32 %v458, %v404
      %v461 = vmul.f32 %v459, %v405
      %v462 = vrot.slane %v460, 4
      %v463 = vadd.f32 %v460, %v462
      %v464 = vrot.slane %v463, 2
      %v465 = vadd.f32 %v463, %v464
      %v466 = vrot.slane %v465, 1
      %v467 = vadd.f32 %v465, %v466
      %v468 = vrot.slane %v461, 4
      %v469 = vadd.f32 %v461, %v468
      %v470 = vrot.slane %v469, 2
      %v471 = vadd.f32 %v469, %v470
      %v472 = vrot.slane %v471, 1
      %v473 = vadd.f32 %v471, %v472
      %v474 = vlog2.pop %v433
      %v475 = vmul.f32 %v474, 0.6931472
      %v476 = vlog2.pop %v439
      %v477 = vmul.f32 %v476, 0.6931472
      %v478 = vadd.f32 %v415, %v475
      %v479 = vadd.f32 %v421, %v477
      %v480 = vsub.f32 %v478, %v467
      %v481 = vsub.f32 %v479, %v473
      %v484 = vcombine.low %v480, %v481
      %v486 = vunpack.c.l.s4 1966171168
      %v487 = vunpack.c.0.s8 %v486
      %v488 = vlaneseq
      %v489 = vshrl.u32 %v488, 7
      %v490 = vsub.s32 %v487, %v489
      %v491 = vrot.slane %v484, %v490
      %v493 = vunpack.c.l.s4 1966171168
      %v494 = vunpack.c.0.s8 %v493
      %v495 = vlaneseq
      %v496 = vshrl.u32 %v495, 7
      %v497 = vsub.s32 %v494, %v496
      %v498 = vrot.slane %v491, %v497
      %v500 = vsel %vm407, %v498, 0.0
      %v501 = vsub.f32 0.0, %v500
      %v502 = vmul.f32 %v501, 1.442695
      %v503 = vpow.pop %v502
      %vm504 = vcmp.eq.s32.totalorder %v443, 1
      %v505 = vsel %vm504, 8.0, 10.0
      %vm506 = vcmp.eq.s32.totalorder %v443, 2
      %v507 = vsel %vm506, 25.0, %v505
      %vm508 = vcmp.eq.s32.totalorder %v443, 3
      %v509 = vsel %vm508, 50.0, %v507
      %vm510 = vcmp.eq.s32.totalorder %v443, 4
      %v511 = vsel %vm510, 50.0, %v509
      %vm512 = vcmp.eq.s32.totalorder %v443, 5
      %v513 = vsel %vm512, 1.0, %v511
      %vm514 = vcmp.eq.s32.totalorder %v443, 6
      %v515 = vsel %vm514, 1.0, %v513
      %vm516 = vcmp.eq.s32.totalorder %v443, 7
      %v517 = vsel %vm516, 10.0, %v515
      %v518 = vsub.f32 1.0, %v503
      %v519 = vmul.f32 %v517, %v518
      %v520 = vmul.f32 %v519, %v518
      %v521 = vmul.f32 %v520, %v500
      %v523 = vlaneseq
      %v524 = vshrl.u32 %v523, 7
      %v525 = vsub.s32 0, %v524
      %v526 = vrot.slane %v521, %v525
      %v527 = vlaneseq
      %v528 = vshrl.u32 %v527, 7
      %v529 = vsub.s32 1, %v528
      %v530 = vrot.slane %v521, %v529
      %vm533 = vcmask 1040384
      %v534 = vsel %vm533, %v526, 0.0
      %v535 = vsel %vm533, %v530, 0.0
      %v536 = vadd.f32 %v534, %v535
      %537 = vadd.xlane.f32.xlu0 %v536
      %v538 = vpop.xlane.xlu0 %537
      %v539 = vrcp.pop %v433
      %v540 = vrcp.pop %v439
      %v542 = vlaneseq
      %v543 = vshrl.u32 %v542, 7
      %v544 = vsub.s32 0, %v543
      %v545 = vrot.slane %v409, %v544
      %v546 = vlaneseq
      %v547 = vshrl.u32 %v546, 7
      %v548 = vsub.s32 1, %v547
      %v549 = vrot.slane %v409, %v548
      %v552 = vmul.f32 %v539, %v545
      %v553 = vmul.f32 %v540, %v549
      %v554 = vmul.f32 %v503, %v409
      %v556 = vlaneseq
      %v557 = vshrl.u32 %v556, 7
      %v558 = vsub.s32 0, %v557
      %v559 = vrot.slane %v554, %v558
      %v560 = vlaneseq
      %v561 = vshrl.u32 %v560, 7
      %v562 = vsub.s32 1, %v561
      %v563 = vrot.slane %v554, %v562
      %v566 = vmul.f32 %v458, %v559
      %v567 = vmul.f32 %v459, %v563
      %v568 = vadd.f32 %v566, %v567
      %569 = vadd.xlane.f32.xlu0 %v568
      %v570 = vpop.xlane.xlu0 %569
      %v571 = vlaneseq
      %v572 = vshrl.u32 %v571, 7
      %v573 = vsub.s32 0, %v572
      %v574 = vrot.slane %v552, %v573
      %v575 = vlaneseq
      %v576 = vshrl.u32 %v575, 7
      %v577 = vsub.s32 0, %v576
      %v578 = vrot.slane %v553, %v577
      %v579 = vmul.f32 %v425, %v574
      %v580 = vmul.f32 %v427, %v578
      %v581 = vadd.f32 %v579, %v580
      %582 = vadd.xlane.f32.xlu0 %v581
      %v583 = vpop.xlane.xlu0 %582
      %v584 = vmul.f32 %v458, %v545
      %v585 = vmul.f32 %v459, %v549
      %v586 = vadd.f32 %v584, %v585
      %587 = vadd.xlane.f32.xlu0 %v586
      %v588 = vpop.xlane.xlu0 %587
      %v589 = vld [vmem:[%s372] sm:$0x1]
      %v590 = vadd.f32 %v589, %v538
      %vm591 = vcmask 0
      %592 = vst.msk [vmem:[%s372] sm:$0x1] %vm591, %v590
      %v593 = vld [vmem:[%s379] sm:$0xff]
      %v594 = vadd.f32 %v593, %v570
      %vm595 = vcmask 7168
      %596 = vst.msk [vmem:[%s379] sm:$0xff] %vm595, %v594
      %v597 = vld [vmem:[%s386] sm:$0xff]
      %v598 = vadd.f32 %v597, %v583
      %599 = vst.msk [vmem:[%s386] sm:$0xff] %vm595, %v598
      %v600 = vld [vmem:[%s393] sm:$0xff]
      %v601 = vadd.f32 %v600, %v588
      %602 = vst.msk [vmem:[%s393] sm:$0xff] %vm595, %v601
      %p603 = scmp.lt.s32.totalorder %s22, 1
      %s604 = scalar_select %p603, %s22, 1
      %p605 = scmp.lt.s32.totalorder %s23, 0
      %s606 = scalar_select %p605, %s23, 0
      %s607 = sadd.s32 %s606, %s604
      %s608 = scalar_lea.vmem %s2, %s607
      %p609 = scmp.lt.s32.totalorder %s22, 1
      %s610 = scalar_select %p609, %s22, 1
      %p611 = scmp.lt.s32.totalorder %s23, 0
      %s612 = scalar_select %p611, %s23, 0
      %s613 = sadd.s32 %s612, %s610
      %s614 = smul.addr %s613, 8
      %s615 = scalar_lea.vmem %s3, %s614
      %p616 = scmp.lt.s32.totalorder %s22, 1
      %s617 = scalar_select %p616, %s22, 1
      %p618 = scmp.lt.s32.totalorder %s23, 0
      %s619 = scalar_select %p618, %s23, 0
      %s620 = sadd.s32 %s619, %s617
      %s621 = smul.addr %s620, 8
      %s622 = scalar_lea.vmem %s4, %s621
      %p623 = scmp.lt.s32.totalorder %s22, 1
      %s624 = scalar_select %p623, %s22, 1
      %p625 = scmp.lt.s32.totalorder %s23, 0
      %s626 = scalar_select %p625, %s23, 0
      %s627 = sadd.s32 %s626, %s624
      %s628 = smul.addr %s627, 8
      %s629 = scalar_lea.vmem %s5, %s628
      // Predicated region
      $region33: #{combined_loss.1} parent=27 // pred_check
        %p630 = pneg %p124
      $region34: #{combined_loss.1} parent=27 // pred_check_branch
        %632 = sbr.rel (%p630) target = $region36
      $region35: #{combined_loss.1} parent=27 // pred_region
        _
      $region36: #{combined_loss.1} parent=27 // pred_fallthru
        _
      // Predicated region
      $region37: #{combined_loss.1} parent=27 // pred_check
        %p633 = pneg %p152
      $region38: #{combined_loss.1} parent=27 // pred_check_branch
        %635 = sbr.rel (%p633) target = $region40
      $region39: #{combined_loss.1} parent=27 // pred_region
        _
      $region40: #{combined_loss.1} parent=27 // pred_fallthru
        _
      // Predicated region
      $region41: #{combined_loss.1} parent=27 // pred_check
        %p636 = pneg %p180
      $region42: #{combined_loss.1} parent=27 // pred_check_branch
        %638 = sbr.rel (%p636) target = $region44
      $region43: #{combined_loss.1} parent=27 // pred_region
        _
      $region44: #{combined_loss.1} parent=27 // pred_fallthru
        _
      // Predicated region
      $region45: #{combined_loss.1} parent=27 // pred_check
        %p639 = pneg %p208
      $region46: #{combined_loss.1} parent=27 // pred_check_branch
        %641 = sbr.rel (%p639) target = $region48
      $region47: #{combined_loss.1} parent=27 // pred_region
        _
      $region48: #{combined_loss.1} parent=27 // pred_fallthru
        _
    $region28: #{combined_loss.1} parent=5 // pred_fallthru
      _
    %p642 = scmp.le.s32.totalorder 2, %s12
    // Predicated region
    $region49: #{combined_loss.1} parent=5 // pred_check
      %p643 = pneg %p642
    $region50: #{combined_loss.1} parent=5 // pred_check_branch
      %645 = sbr.rel (%p643) target = $region52
    $region51: #{combined_loss.1} parent=5 // pred_region
      %s646 = ssub.s32 %s12, 2
      // Predicated region
      $region53: #{combined_loss.1} parent=51 // pred_check
        %p647 = pneg %p130
      $region54: #{combined_loss.1} parent=51 // pred_check_branch
        %649 = sbr.rel (%p647) target = $region56
      $region55: #{combined_loss.1} parent=51 // pred_region
        %p650 = scmp.lt.s32.totalorder %s25, 1
        %s651 = scalar_select %p650, %s25, 1
        %p652 = scmp.lt.s32.totalorder %s26, 0
        %s653 = scalar_select %p652, %s26, 0
        %s654 = sadd.s32 %s653, %s651
        %s655 = scalar_lea.vmem %s2, %s654
      $region56: #{combined_loss.1} parent=51 // pred_fallthru
        _
      // Predicated region
      $region57: #{combined_loss.1} parent=51 // pred_check
        %p656 = pneg %p158
      $region58: #{combined_loss.1} parent=51 // pred_check_branch
        %658 = sbr.rel (%p656) target = $region60
      $region59: #{combined_loss.1} parent=51 // pred_region
        %p659 = scmp.lt.s32.totalorder %s25, 1
        %s660 = scalar_select %p659, %s25, 1
        %p661 = scmp.lt.s32.totalorder %s26, 0
        %s662 = scalar_select %p661, %s26, 0
        %s663 = sadd.s32 %s662, %s660
        %s664 = smul.addr %s663, 8
        %s665 = scalar_lea.vmem %s3, %s664
      $region60: #{combined_loss.1} parent=51 // pred_fallthru
        _
      // Predicated region
      $region61: #{combined_loss.1} parent=51 // pred_check
        %p666 = pneg %p186
      $region62: #{combined_loss.1} parent=51 // pred_check_branch
        %668 = sbr.rel (%p666) target = $region64
      $region63: #{combined_loss.1} parent=51 // pred_region
        %p669 = scmp.lt.s32.totalorder %s25, 1
        %s670 = scalar_select %p669, %s25, 1
        %p671 = scmp.lt.s32.totalorder %s26, 0
        %s672 = scalar_select %p671, %s26, 0
        %s673 = sadd.s32 %s672, %s670
        %s674 = smul.addr %s673, 8
        %s675 = scalar_lea.vmem %s4, %s674
      $region64: #{combined_loss.1} parent=51 // pred_fallthru
        _
      // Predicated region
      $region65: #{combined_loss.1} parent=51 // pred_check
        %p676 = pneg %p214
      $region66: #{combined_loss.1} parent=51 // pred_check_branch
        %678 = sbr.rel (%p676) target = $region68
      $region67: #{combined_loss.1} parent=51 // pred_region
        %p679 = scmp.lt.s32.totalorder %s25, 1
        %s680 = scalar_select %p679, %s25, 1
        %p681 = scmp.lt.s32.totalorder %s26, 0
        %s682 = scalar_select %p681, %s26, 0
        %s683 = sadd.s32 %s682, %s680
        %s684 = smul.addr %s683, 8
        %s685 = scalar_lea.vmem %s5, %s684
      $region68: #{combined_loss.1} parent=51 // pred_fallthru
        _
    $region52: #{combined_loss.1} parent=5 // pred_fallthru
      _
  $region6: #{combined_loss.1} parent=0 // loop_footer
    %s16 = sadd.s32 1, %s12
  $region7: #{combined_loss.1} parent=0 // loop_footer_branch
    %11 = sbr.rel target = $region3
  $region8: #{combined_loss.1} parent=0 // loop_exit
    _

</llo_original>
